<compile_context>
chip_gen: v6e
topology: v6e:2x2x1
jax: 0.10.0
libtpu: 0.0.40
codegen_flags: <defaults>
</compile_context>

<pallas_src>
import functools

import jax
import jax.numpy as jnp
from jax.experimental import pallas as pl
from jax.experimental.pallas import tpu as pltpu

_LANES = 128                # lane width: pad feature dim to a multiple of this
_SUBLANES = 8               # batch tiles are multiples of the sublane count
_EPS = 1e-5
_TILE_B_CAP = 1024          # sanity cap; the real cap is the VMEM budget
_MIN_GRID_STEPS = 4         # >=2 steps so v7x's 2 TCs split the batch axis
_VMEM_BUDGET = 48 << 20     # stays inside v7x's 64 MiB physical VMEM


def _round_up(n, m):
    return ((n + m - 1) // m) * m


def _silu(v):
    # x * sigmoid(x) in the single-tanh form: one EUP op per element.
    return v * (0.5 * jnp.tanh(0.5 * v) + 0.5)


def _residual_block_kernel(x_ref, et_ref, ey_ref, wf_ref, wt_ref, wc_ref,
                           bias_ref, gamma_ref, beta_ref, o_ref, *,
                           out_features):
    # MXU dots consume the streamed operands in their native (possibly bf16)
    # dtype and accumulate in f32.
    h = jnp.dot(x_ref[...], wf_ref[...], preferred_element_type=jnp.float32)
    h = h + jnp.dot(_silu(et_ref[...]), wt_ref[...],
                    preferred_element_type=jnp.float32)
    h = h + jnp.dot(_silu(ey_ref[...]), wc_ref[...],
                    preferred_element_type=jnp.float32)
    h = h + bias_ref[...]                               # fused bf + bt + bc (f32)

    # LayerNorm statistics in f32 over the *true* feature count.  Padded
    # weight/bias columns are exactly zero, so the full-lane sums already
    # equal the sums over the real features.
    inv_n = jnp.float32(1.0 / out_features)
    mean = jnp.sum(h, axis=-1, keepdims=True) * inv_n
    mean_sq = jnp.sum(h * h, axis=-1, keepdims=True) * inv_n
    var = jnp.maximum(mean_sq - mean * mean, 0.0)       # cancellation guard
    hn = (h - mean) * jax.lax.rsqrt(var + _EPS)
    hn = hn * gamma_ref[...] + beta_ref[...]            # padded gamma/beta are 0

    # Final SiLU in the output dtype (bf16 VALU/EUP on v6e/v7x);
    # dropout = identity in eval mode.
    o_ref[...] = _silu(hn.astype(o_ref.dtype))


def prepare_params(params, *, param_dtype=None):
    """One-time parameter preparation (call at init, NOT per forward):
    fuse the three biases, zero-pad the feature (lane) axis to a multiple of
    128, and cast the weight matrices to `param_dtype` (e.g. bf16)."""
    out_features = params["wf"].shape[1]
    f_pad = _round_up(out_features, _LANES)
    pad = f_pad - out_features

    def pad_f(a):
        return a if pad == 0 else jnp.pad(a, ((0, 0), (0, pad)))

    wdt = jnp.dtype(param_dtype) if param_dtype is not None else params["wf"].dtype
    return dict(
        wf=pad_f(params["wf"]).astype(wdt),
        wt=pad_f(params["wt"]).astype(wdt),
        wc=pad_f(params["wc"]).astype(wdt),
        # bias / gamma / beta stay f32: tiny, and they feed the f32 LN math.
        bias=pad_f((params["bf"] + params["bt"] + params["bc"]).astype(jnp.float32)),
        gamma=pad_f(params["gamma"].astype(jnp.float32)),
        beta=pad_f(params["beta"].astype(jnp.float32)),
        out_features=out_features,
    )


def residual_block(x, emb_t, emb_y, prepared, *, unpad=True):
    """x: [B, in], emb_t: [B, time], emb_y: [B, cond] -> [B, out] (eval mode)."""
    B, in_features = x.shape
    time_features = emb_t.shape[1]
    cond_features = emb_y.shape[1]
    out_features = prepared["out_features"]
    f_pad = prepared["wf"].shape[1]
    out_dtype = x.dtype

    # --- VMEM-budgeted tiling over the batch axis ---------------------------
    act_bytes = (jnp.dtype(x.dtype).itemsize * in_features
                 + jnp.dtype(emb_t.dtype).itemsize * time_features
                 + jnp.dtype(emb_y.dtype).itemsize * cond_features
                 + jnp.dtype(out_dtype).itemsize * f_pad)       # per row, 2x buffered
    weight_bytes = int(sum(
        prepared[k].size * jnp.dtype(prepared[k].dtype).itemsize
        for k in ("wf", "wt", "wc", "bias", "gamma", "beta")))  # 1x buffered
    budget_rows = max(_SUBLANES,
                      ((_VMEM_BUDGET - weight_bytes) // (2 * act_bytes))
                      // _SUBLANES * _SUBLANES)
    target_rows = _round_up(pl.cdiv(B, _MIN_GRID_STEPS), _SUBLANES)
    tile_b = max(_SUBLANES, min(_TILE_B_CAP, budget_rows, target_rows))
    grid = (pl.cdiv(B, tile_b),)

    vmem_need = 2 * tile_b * act_bytes + weight_bytes
    vmem_limit = int(min(max(vmem_need + (4 << 20), 16 << 20), 60 << 20))

    # Advisory cost estimate (dtype-aware) for XLA's scheduler.
    flops = (2 * B * (in_features + time_features + cond_features) * f_pad
             + 10 * B * f_pad)
    transcendentals = B * (time_features + cond_features + f_pad)
    bytes_accessed = (x.size * jnp.dtype(x.dtype).itemsize
                      + emb_t.size * jnp.dtype(emb_t.dtype).itemsize
                      + emb_y.size * jnp.dtype(emb_y.dtype).itemsize
                      + weight_bytes
                      + B * f_pad * jnp.dtype(out_dtype).itemsize)

    kernel = functools.partial(_residual_block_kernel, out_features=out_features)
    row_spec = lambda feat: pl.BlockSpec((tile_b, feat), lambda i: (i, 0))

    def call(single_buffer_weights):
        if single_buffer_weights:
            # Grid-invariant operands: single buffer (constant index_map already
            # skips the re-fetch; Buffered(1) also stops the pipeline from
            # allocating a useless second copy of the weights in VMEM).
            resident = lambda shape: pl.BlockSpec(
                shape, lambda i: (0, 0), pipeline_mode=pl.Buffered(1))
        else:
            resident = lambda shape: pl.BlockSpec(shape, lambda i: (0, 0))

        in_specs = [
            row_spec(in_features),                 # x      (streamed per tile)
            row_spec(time_features),               # emb_t  (streamed per tile)
            row_spec(cond_features),               # emb_y  (streamed per tile)
            resident((in_features, f_pad)),        # Wf     (VMEM-resident)
            resident((time_features, f_pad)),      # Wt
            resident((cond_features, f_pad)),      # Wc
            resident((1, f_pad)),                  # fused bias
            resident((1, f_pad)),                  # gamma
            resident((1, f_pad)),                  # beta
        ]
        out_specs = pl.BlockSpec((tile_b, f_pad), lambda i: (i, 0))

        return pl.pallas_call(
            kernel,
            out_shape=jax.ShapeDtypeStruct((B, f_pad), out_dtype),
            grid=grid,
            in_specs=in_specs,
            out_specs=out_specs,
            compiler_params=pltpu.CompilerParams(
                dimension_semantics=("parallel",),
                vmem_limit_bytes=vmem_limit),
            cost_estimate=pl.CostEstimate(
                flops=flops,
                transcendentals=transcendentals,
                bytes_accessed=bytes_accessed),
        )(x, emb_t, emb_y, prepared["wf"], prepared["wt"], prepared["wc"],
          prepared["bias"], prepared["gamma"], prepared["beta"])

    try:
        out_padded = call(True)
    except Exception:  # jax builds without pipeline_mode on this path
        out_padded = call(False)

    if unpad and f_pad != out_features:
        # Padded lanes are exactly zero: downstream consumers can take the
        # padded layout (unpad=False) and skip this extra HBM copy.
        return out_padded[:, :out_features]
    return out_padded


def _reference(x, emb_t, emb_y, p):
    h = x @ p["wf"] + p["bf"]
    h = h + jax.nn.silu(emb_t) @ p["wt"] + p["bt"]
    h = h + jax.nn.silu(emb_y) @ p["wc"] + p["bc"]
    mean = jnp.mean(h, axis=-1, keepdims=True)
    var = jnp.mean((h - mean) ** 2, axis=-1, keepdims=True)
    h = (h - mean) * jax.lax.rsqrt(var + _EPS) * p["gamma"] + p["beta"]
    return jax.nn.silu(h)


if __name__ == "__main__":
    # Small shapes implied by the forward: x:[B,in], emb_t:[B,time], emb_y:[B,cond]
    B, in_features, out_features = 8, 32, 64
    time_features, cond_features = 16, 24

    key = jax.random.PRNGKey(0)
    keys = jax.random.split(key, 9)

    x = jax.random.normal(keys[0], (B, in_features), dtype=jnp.float32)
    emb_t = jax.random.normal(keys[1], (B, time_features), dtype=jnp.float32)
    emb_y = jax.random.normal(keys[2], (B, cond_features), dtype=jnp.float32)

    def linear_init(kw, kb, fan_in, fan_out):
        bound = 1.0 / (fan_in ** 0.5)
        w = jax.random.uniform(kw, (fan_in, fan_out), jnp.float32, -bound, bound)
        b = jax.random.uniform(kb, (1, fan_out), jnp.float32, -bound, bound)
        return w, b

    wf, bf = linear_init(keys[3], keys[4], in_features, out_features)
    wt, bt = linear_init(keys[5], keys[6], time_features, out_features)
    wc, bc = linear_init(keys[7], keys[8], cond_features, out_features)

    params = dict(
        wf=wf, bf=bf, wt=wt, bt=bt, wc=wc, bc=bc,
        gamma=jnp.ones((1, out_features), jnp.float32),
        beta=jnp.zeros((1, out_features), jnp.float32),
    )
    ref = _reference(x, emb_t, emb_y, params)

    # f32 path (tight tolerance against the pure-JAX reference).
    prep_f32 = prepare_params(params)
    out = jax.block_until_ready(residual_block(x, emb_t, emb_y, prep_f32))
    assert out.shape == (B, out_features)
    assert jnp.allclose(out, ref, atol=1e-4, rtol=1e-4), (
        float(jnp.max(jnp.abs(out - ref))))

    # bf16 streaming path: activations + weights in bf16 (cast once at init),
    # LayerNorm statistics still f32 inside the kernel; loose tolerance.
    prep_bf16 = prepare_params(params, param_dtype=jnp.bfloat16)
    out_bf16 = jax.block_until_ready(
        residual_block(x.astype(jnp.bfloat16), emb_t.astype(jnp.bfloat16),
                       emb_y.astype(jnp.bfloat16), prep_bf16))
    assert out_bf16.shape == (B, out_features)
    assert out_bf16.dtype == jnp.bfloat16
    err = float(jnp.max(jnp.abs(out_bf16.astype(jnp.float32) - ref)))
    assert jnp.allclose(out_bf16.astype(jnp.float32), ref, atol=0.1, rtol=0.1), err

    print("KERNEL_OK")
</pallas_src>

<mosaic_0001>
module attributes {stable_mosaic.version = 11 : i64} {
  func.func @_residual_block_kernel(%arg0: i32, %arg1: memref<8x32xf32, #tpu.memory_space<vmem>>, %arg2: memref<8x16xf32, #tpu.memory_space<vmem>>, %arg3: memref<8x24xf32, #tpu.memory_space<vmem>>, %arg4: memref<32x128xf32, #tpu.memory_space<vmem>>, %arg5: memref<16x128xf32, #tpu.memory_space<vmem>>, %arg6: memref<24x128xf32, #tpu.memory_space<vmem>>, %arg7: memref<1x128xf32, #tpu.memory_space<vmem>>, %arg8: memref<1x128xf32, #tpu.memory_space<vmem>>, %arg9: memref<1x128xf32, #tpu.memory_space<vmem>>, %arg10: memref<8x128xf32, #tpu.memory_space<vmem>>) attributes {dimension_semantics = [#tpu.dimension_semantics<parallel>], iteration_bounds = array<i64: 1>, scalar_prefetch = 0 : i64, scratch_operands = 0 : i64, tpu.core_type = #tpu.core_type<tc>, window_params = [{transform_indices = @transform_0, window_bounds = array<i64: 8, 32>}, {transform_indices = @transform_1, window_bounds = array<i64: 8, 16>}, {transform_indices = @transform_2, window_bounds = array<i64: 8, 24>}, {pipeline_mode = #tpu.pipeline_mode<synchronous>, transform_indices = @transform_3, window_bounds = array<i64: 32, 128>}, {pipeline_mode = #tpu.pipeline_mode<synchronous>, transform_indices = @transform_4, window_bounds = array<i64: 16, 128>}, {pipeline_mode = #tpu.pipeline_mode<synchronous>, transform_indices = @transform_5, window_bounds = array<i64: 24, 128>}, {pipeline_mode = #tpu.pipeline_mode<synchronous>, transform_indices = @transform_6, window_bounds = array<i64: 1, 128>}, {pipeline_mode = #tpu.pipeline_mode<synchronous>, transform_indices = @transform_7, window_bounds = array<i64: 1, 128>}, {pipeline_mode = #tpu.pipeline_mode<synchronous>, transform_indices = @transform_8, window_bounds = array<i64: 1, 128>}, {transform_indices = @transform_9, window_bounds = array<i64: 8, 128>}]} {
    %c0 = arith.constant 0 : index
    %c0_0 = arith.constant 0 : index
    %0 = vector.load %arg1[%c0, %c0_0] : memref<8x32xf32, #tpu.memory_space<vmem>>, vector<8x32xf32>
    %c0_1 = arith.constant 0 : index
    %c0_2 = arith.constant 0 : index
    %1 = vector.load %arg4[%c0_1, %c0_2] : memref<32x128xf32, #tpu.memory_space<vmem>>, vector<32x128xf32>
    %cst = arith.constant dense<0.000000e+00> : vector<8x128xf32>
    %2 = tpu.matmul %0, %1, %cst {dimension_numbers = #tpu.dot_dimension_numbers<[1], [0], [0], [1], [0, 0, 1, 1], [], []>} : vector<8x32xf32>, vector<32x128xf32>, vector<8x128xf32> -> vector<8x128xf32>
    %c0_3 = arith.constant 0 : index
    %c0_4 = arith.constant 0 : index
    %3 = vector.load %arg2[%c0_3, %c0_4] : memref<8x16xf32, #tpu.memory_space<vmem>>, vector<8x16xf32>
    %cst_5 = arith.constant 5.000000e-01 : f32
    %4 = vector.broadcast %cst_5 : f32 to vector<8x16xf32>
    %5 = arith.mulf %4, %3 : vector<8x16xf32>
    %6 = math.tanh %5 : vector<8x16xf32>
    %cst_6 = arith.constant 5.000000e-01 : f32
    %7 = vector.broadcast %cst_6 : f32 to vector<8x16xf32>
    %8 = arith.mulf %7, %6 : vector<8x16xf32>
    %cst_7 = arith.constant 5.000000e-01 : f32
    %9 = vector.broadcast %cst_7 : f32 to vector<8x16xf32>
    %10 = arith.addf %8, %9 : vector<8x16xf32>
    %11 = arith.mulf %3, %10 : vector<8x16xf32>
    %c0_8 = arith.constant 0 : index
    %c0_9 = arith.constant 0 : index
    %12 = vector.load %arg5[%c0_8, %c0_9] : memref<16x128xf32, #tpu.memory_space<vmem>>, vector<16x128xf32>
    %cst_10 = arith.constant dense<0.000000e+00> : vector<8x128xf32>
    %13 = tpu.matmul %11, %12, %cst_10 {dimension_numbers = #tpu.dot_dimension_numbers<[1], [0], [0], [1], [0, 0, 1, 1], [], []>} : vector<8x16xf32>, vector<16x128xf32>, vector<8x128xf32> -> vector<8x128xf32>
    %14 = arith.addf %2, %13 : vector<8x128xf32>
    %c0_11 = arith.constant 0 : index
    %c0_12 = arith.constant 0 : index
    %15 = vector.load %arg3[%c0_11, %c0_12] : memref<8x24xf32, #tpu.memory_space<vmem>>, vector<8x24xf32>
    %cst_13 = arith.constant 5.000000e-01 : f32
    %16 = vector.broadcast %cst_13 : f32 to vector<8x24xf32>
    %17 = arith.mulf %16, %15 : vector<8x24xf32>
    %18 = math.tanh %17 : vector<8x24xf32>
    %cst_14 = arith.constant 5.000000e-01 : f32
    %19 = vector.broadcast %cst_14 : f32 to vector<8x24xf32>
    %20 = arith.mulf %19, %18 : vector<8x24xf32>
    %cst_15 = arith.constant 5.000000e-01 : f32
    %21 = vector.broadcast %cst_15 : f32 to vector<8x24xf32>
    %22 = arith.addf %20, %21 : vector<8x24xf32>
    %23 = arith.mulf %15, %22 : vector<8x24xf32>
    %c0_16 = arith.constant 0 : index
    %c0_17 = arith.constant 0 : index
    %24 = vector.load %arg6[%c0_16, %c0_17] : memref<24x128xf32, #tpu.memory_space<vmem>>, vector<24x128xf32>
    %cst_18 = arith.constant dense<0.000000e+00> : vector<8x128xf32>
    %25 = tpu.matmul %23, %24, %cst_18 {dimension_numbers = #tpu.dot_dimension_numbers<[1], [0], [0], [1], [0, 0, 1, 1], [], []>} : vector<8x24xf32>, vector<24x128xf32>, vector<8x128xf32> -> vector<8x128xf32>
    %26 = arith.addf %14, %25 : vector<8x128xf32>
    %c0_19 = arith.constant 0 : index
    %c0_20 = arith.constant 0 : index
    %27 = vector.load %arg7[%c0_19, %c0_20] : memref<1x128xf32, #tpu.memory_space<vmem>>, vector<1x128xf32>
    %28 = vector.broadcast %27 : vector<1x128xf32> to vector<8x128xf32>
    %29 = arith.addf %26, %28 : vector<8x128xf32>
    %cst_21 = arith.constant dense<0.000000e+00> : vector<8xf32>
    %30 = vector.multi_reduction <add>, %29, %cst_21 [1] : vector<8x128xf32> to vector<8xf32>
    %31 = vector.shape_cast %30 : vector<8xf32> to vector<8x1xf32>
    %cst_22 = arith.constant 1.562500e-02 : f32
    %32 = vector.broadcast %cst_22 : f32 to vector<8x1xf32>
    %33 = arith.mulf %31, %32 : vector<8x1xf32>
    %34 = arith.mulf %29, %29 : vector<8x128xf32>
    %cst_23 = arith.constant dense<0.000000e+00> : vector<8xf32>
    %35 = vector.multi_reduction <add>, %34, %cst_23 [1] : vector<8x128xf32> to vector<8xf32>
    %36 = vector.shape_cast %35 : vector<8xf32> to vector<8x1xf32>
    %cst_24 = arith.constant 1.562500e-02 : f32
    %37 = vector.broadcast %cst_24 : f32 to vector<8x1xf32>
    %38 = arith.mulf %36, %37 : vector<8x1xf32>
    %39 = arith.mulf %33, %33 : vector<8x1xf32>
    %40 = arith.subf %38, %39 : vector<8x1xf32>
    %cst_25 = arith.constant 0.000000e+00 : f32
    %41 = vector.broadcast %cst_25 : f32 to vector<8x1xf32>
    %42 = arith.maximumf %40, %41 : vector<8x1xf32>
    %43 = vector.broadcast %33 : vector<8x1xf32> to vector<8x128xf32>
    %44 = arith.subf %29, %43 : vector<8x128xf32>
    %cst_26 = arith.constant 9.99999974E-6 : f32
    %45 = vector.broadcast %cst_26 : f32 to vector<8x1xf32>
    %46 = arith.addf %42, %45 : vector<8x1xf32>
    %47 = math.rsqrt %46 : vector<8x1xf32>
    %48 = vector.broadcast %47 : vector<8x1xf32> to vector<8x128xf32>
    %49 = arith.mulf %44, %48 : vector<8x128xf32>
    %c0_27 = arith.constant 0 : index
    %c0_28 = arith.constant 0 : index
    %50 = vector.load %arg8[%c0_27, %c0_28] : memref<1x128xf32, #tpu.memory_space<vmem>>, vector<1x128xf32>
    %51 = vector.broadcast %50 : vector<1x128xf32> to vector<8x128xf32>
    %52 = arith.mulf %49, %51 : vector<8x128xf32>
    %c0_29 = arith.constant 0 : index
    %c0_30 = arith.constant 0 : index
    %53 = vector.load %arg9[%c0_29, %c0_30] : memref<1x128xf32, #tpu.memory_space<vmem>>, vector<1x128xf32>
    %54 = vector.broadcast %53 : vector<1x128xf32> to vector<8x128xf32>
    %55 = arith.addf %52, %54 : vector<8x128xf32>
    %cst_31 = arith.constant 5.000000e-01 : f32
    %56 = vector.broadcast %cst_31 : f32 to vector<8x128xf32>
    %57 = arith.mulf %56, %55 : vector<8x128xf32>
    %58 = math.tanh %57 : vector<8x128xf32>
    %cst_32 = arith.constant 5.000000e-01 : f32
    %59 = vector.broadcast %cst_32 : f32 to vector<8x128xf32>
    %60 = arith.mulf %59, %58 : vector<8x128xf32>
    %cst_33 = arith.constant 5.000000e-01 : f32
    %61 = vector.broadcast %cst_33 : f32 to vector<8x128xf32>
    %62 = arith.addf %60, %61 : vector<8x128xf32>
    %63 = arith.mulf %55, %62 : vector<8x128xf32>
    %c0_34 = arith.constant 0 : index
    %c0_35 = arith.constant 0 : index
    %64 = vector.load %arg10[%c0_34, %c0_35] : memref<8x128xf32, #tpu.memory_space<vmem>>, vector<8x128xf32>
    tpu.vector_store %arg10[%c0_34, %c0_35], %63 {strides = array<i32>} : memref<8x128xf32, #tpu.memory_space<vmem>>, vector<8x128xf32>,
    return
  }
  func.func @transform_0(%arg0: i32) -> (i32, i32) {
    %c0_i32 = arith.constant 0 : i32
    %c0_i32_0 = arith.constant 0 : i32
    return %arg0, %c0_i32 : i32, i32
  }
  func.func @transform_1(%arg0: i32) -> (i32, i32) {
    %c0_i32 = arith.constant 0 : i32
    %c0_i32_0 = arith.constant 0 : i32
    return %arg0, %c0_i32 : i32, i32
  }
  func.func @transform_2(%arg0: i32) -> (i32, i32) {
    %c0_i32 = arith.constant 0 : i32
    %c0_i32_0 = arith.constant 0 : i32
    return %arg0, %c0_i32 : i32, i32
  }
  func.func @transform_3(%arg0: i32) -> (i32, i32) {
    %c0_i32 = arith.constant 0 : i32
    %c0_i32_0 = arith.constant 0 : i32
    %c0_i32_1 = arith.constant 0 : i32
    return %c0_i32, %c0_i32_0 : i32, i32
  }
  func.func @transform_4(%arg0: i32) -> (i32, i32) {
    %c0_i32 = arith.constant 0 : i32
    %c0_i32_0 = arith.constant 0 : i32
    %c0_i32_1 = arith.constant 0 : i32
    return %c0_i32, %c0_i32_0 : i32, i32
  }
  func.func @transform_5(%arg0: i32) -> (i32, i32) {
    %c0_i32 = arith.constant 0 : i32
    %c0_i32_0 = arith.constant 0 : i32
    %c0_i32_1 = arith.constant 0 : i32
    return %c0_i32, %c0_i32_0 : i32, i32
  }
  func.func @transform_6(%arg0: i32) -> (i32, i32) {
    %c0_i32 = arith.constant 0 : i32
    %c0_i32_0 = arith.constant 0 : i32
    %c0_i32_1 = arith.constant 0 : i32
    return %c0_i32, %c0_i32_0 : i32, i32
  }
  func.func @transform_7(%arg0: i32) -> (i32, i32) {
    %c0_i32 = arith.constant 0 : i32
    %c0_i32_0 = arith.constant 0 : i32
    %c0_i32_1 = arith.constant 0 : i32
    return %c0_i32, %c0_i32_0 : i32, i32
  }
  func.func @transform_8(%arg0: i32) -> (i32, i32) {
    %c0_i32 = arith.constant 0 : i32
    %c0_i32_0 = arith.constant 0 : i32
    %c0_i32_1 = arith.constant 0 : i32
    return %c0_i32, %c0_i32_0 : i32, i32
  }
  func.func @transform_9(%arg0: i32) -> (i32, i32) {
    %c0_i32 = arith.constant 0 : i32
    %c0_i32_0 = arith.constant 0 : i32
    return %arg0, %c0_i32 : i32, i32
  }
}

module attributes {stable_mosaic.version = 11 : i64} {
  func.func @_residual_block_kernel(%arg0: i32, %arg1: memref<8x32xf32, #tpu.memory_space<vmem>>, %arg2: memref<8x16xf32, #tpu.memory_space<vmem>>, %arg3: memref<8x24xf32, #tpu.memory_space<vmem>>, %arg4: memref<32x128xf32, #tpu.memory_space<vmem>>, %arg5: memref<16x128xf32, #tpu.memory_space<vmem>>, %arg6: memref<24x128xf32, #tpu.memory_space<vmem>>, %arg7: memref<1x128xf32, #tpu.memory_space<vmem>>, %arg8: memref<1x128xf32, #tpu.memory_space<vmem>>, %arg9: memref<1x128xf32, #tpu.memory_space<vmem>>, %arg10: memref<8x128xf32, #tpu.memory_space<vmem>>) attributes {dimension_semantics = [#tpu.dimension_semantics<parallel>], iteration_bounds = array<i64: 1>, scalar_prefetch = 0 : i64, scratch_operands = 0 : i64, tpu.core_type = #tpu.core_type<tc>, window_params = [{transform_indices = @transform_0, window_bounds = array<i64: 8, 32>}, {transform_indices = @transform_1, window_bounds = array<i64: 8, 16>}, {transform_indices = @transform_2, window_bounds = array<i64: 8, 24>}, {pipeline_mode = #tpu.pipeline_mode<synchronous>, transform_indices = @transform_3, window_bounds = array<i64: 32, 128>}, {pipeline_mode = #tpu.pipeline_mode<synchronous>, transform_indices = @transform_4, window_bounds = array<i64: 16, 128>}, {pipeline_mode = #tpu.pipeline_mode<synchronous>, transform_indices = @transform_5, window_bounds = array<i64: 24, 128>}, {pipeline_mode = #tpu.pipeline_mode<synchronous>, transform_indices = @transform_6, window_bounds = array<i64: 1, 128>}, {pipeline_mode = #tpu.pipeline_mode<synchronous>, transform_indices = @transform_7, window_bounds = array<i64: 1, 128>}, {pipeline_mode = #tpu.pipeline_mode<synchronous>, transform_indices = @transform_8, window_bounds = array<i64: 1, 128>}, {transform_indices = @transform_9, window_bounds = array<i64: 8, 128>}]} {
    %c0 = arith.constant 0 : index
    %c0_0 = arith.constant 0 : index
    %0 = vector.load %arg1[%c0, %c0_0] : memref<8x32xf32, #tpu.memory_space<vmem>>, vector<8x32xf32>
    %c0_1 = arith.constant 0 : index
    %c0_2 = arith.constant 0 : index
    %1 = vector.load %arg4[%c0_1, %c0_2] : memref<32x128xf32, #tpu.memory_space<vmem>>, vector<32x128xf32>
    %cst = arith.constant dense<0.000000e+00> : vector<8x128xf32>
    %2 = tpu.matmul %0, %1, %cst {dimension_numbers = #tpu.dot_dimension_numbers<[1], [0], [0], [1], [0, 0, 1, 1], [], []>} : vector<8x32xf32>, vector<32x128xf32>, vector<8x128xf32> -> vector<8x128xf32>
    %c0_3 = arith.constant 0 : index
    %c0_4 = arith.constant 0 : index
    %3 = vector.load %arg2[%c0_3, %c0_4] : memref<8x16xf32, #tpu.memory_space<vmem>>, vector<8x16xf32>
    %cst_5 = arith.constant 5.000000e-01 : f32
    %4 = vector.broadcast %cst_5 : f32 to vector<8x16xf32>
    %5 = arith.mulf %4, %3 : vector<8x16xf32>
    %6 = math.tanh %5 : vector<8x16xf32>
    %cst_6 = arith.constant 5.000000e-01 : f32
    %7 = vector.broadcast %cst_6 : f32 to vector<8x16xf32>
    %8 = arith.mulf %7, %6 : vector<8x16xf32>
    %cst_7 = arith.constant 5.000000e-01 : f32
    %9 = vector.broadcast %cst_7 : f32 to vector<8x16xf32>
    %10 = arith.addf %8, %9 : vector<8x16xf32>
    %11 = arith.mulf %3, %10 : vector<8x16xf32>
    %c0_8 = arith.constant 0 : index
    %c0_9 = arith.constant 0 : index
    %12 = vector.load %arg5[%c0_8, %c0_9] : memref<16x128xf32, #tpu.memory_space<vmem>>, vector<16x128xf32>
    %cst_10 = arith.constant dense<0.000000e+00> : vector<8x128xf32>
    %13 = tpu.matmul %11, %12, %cst_10 {dimension_numbers = #tpu.dot_dimension_numbers<[1], [0], [0], [1], [0, 0, 1, 1], [], []>} : vector<8x16xf32>, vector<16x128xf32>, vector<8x128xf32> -> vector<8x128xf32>
    %14 = arith.addf %2, %13 : vector<8x128xf32>
    %c0_11 = arith.constant 0 : index
    %c0_12 = arith.constant 0 : index
    %15 = vector.load %arg3[%c0_11, %c0_12] : memref<8x24xf32, #tpu.memory_space<vmem>>, vector<8x24xf32>
    %cst_13 = arith.constant 5.000000e-01 : f32
    %16 = vector.broadcast %cst_13 : f32 to vector<8x24xf32>
    %17 = arith.mulf %16, %15 : vector<8x24xf32>
    %18 = math.tanh %17 : vector<8x24xf32>
    %cst_14 = arith.constant 5.000000e-01 : f32
    %19 = vector.broadcast %cst_14 : f32 to vector<8x24xf32>
    %20 = arith.mulf %19, %18 : vector<8x24xf32>
    %cst_15 = arith.constant 5.000000e-01 : f32
    %21 = vector.broadcast %cst_15 : f32 to vector<8x24xf32>
    %22 = arith.addf %20, %21 : vector<8x24xf32>
    %23 = arith.mulf %15, %22 : vector<8x24xf32>
    %c0_16 = arith.constant 0 : index
    %c0_17 = arith.constant 0 : index
    %24 = vector.load %arg6[%c0_16, %c0_17] : memref<24x128xf32, #tpu.memory_space<vmem>>, vector<24x128xf32>
    %cst_18 = arith.constant dense<0.000000e+00> : vector<8x128xf32>
    %25 = tpu.matmul %23, %24, %cst_18 {dimension_numbers = #tpu.dot_dimension_numbers<[1], [0], [0], [1], [0, 0, 1, 1], [], []>} : vector<8x24xf32>, vector<24x128xf32>, vector<8x128xf32> -> vector<8x128xf32>
    %26 = arith.addf %14, %25 : vector<8x128xf32>
    %c0_19 = arith.constant 0 : index
    %c0_20 = arith.constant 0 : index
    %27 = vector.load %arg7[%c0_19, %c0_20] : memref<1x128xf32, #tpu.memory_space<vmem>>, vector<1x128xf32>
    %28 = vector.broadcast %27 : vector<1x128xf32> to vector<8x128xf32>
    %29 = arith.addf %26, %28 : vector<8x128xf32>
    %cst_21 = arith.constant dense<0.000000e+00> : vector<8xf32>
    %30 = vector.multi_reduction <add>, %29, %cst_21 [1] : vector<8x128xf32> to vector<8xf32>
    %31 = vector.shape_cast %30 : vector<8xf32> to vector<8x1xf32>
    %cst_22 = arith.constant 1.562500e-02 : f32
    %32 = vector.broadcast %cst_22 : f32 to vector<8x1xf32>
    %33 = arith.mulf %31, %32 : vector<8x1xf32>
    %34 = arith.mulf %29, %29 : vector<8x128xf32>
    %cst_23 = arith.constant dense<0.000000e+00> : vector<8xf32>
    %35 = vector.multi_reduction <add>, %34, %cst_23 [1] : vector<8x128xf32> to vector<8xf32>
    %36 = vector.shape_cast %35 : vector<8xf32> to vector<8x1xf32>
    %cst_24 = arith.constant 1.562500e-02 : f32
    %37 = vector.broadcast %cst_24 : f32 to vector<8x1xf32>
    %38 = arith.mulf %36, %37 : vector<8x1xf32>
    %39 = arith.mulf %33, %33 : vector<8x1xf32>
    %40 = arith.subf %38, %39 : vector<8x1xf32>
    %cst_25 = arith.constant 0.000000e+00 : f32
    %41 = vector.broadcast %cst_25 : f32 to vector<8x1xf32>
    %42 = arith.maximumf %40, %41 : vector<8x1xf32>
    %43 = vector.broadcast %33 : vector<8x1xf32> to vector<8x128xf32>
    %44 = arith.subf %29, %43 : vector<8x128xf32>
    %cst_26 = arith.constant 9.99999974E-6 : f32
    %45 = vector.broadcast %cst_26 : f32 to vector<8x1xf32>
    %46 = arith.addf %42, %45 : vector<8x1xf32>
    %47 = math.rsqrt %46 : vector<8x1xf32>
    %48 = vector.broadcast %47 : vector<8x1xf32> to vector<8x128xf32>
    %49 = arith.mulf %44, %48 : vector<8x128xf32>
    %c0_27 = arith.constant 0 : index
    %c0_28 = arith.constant 0 : index
    %50 = vector.load %arg8[%c0_27, %c0_28] : memref<1x128xf32, #tpu.memory_space<vmem>>, vector<1x128xf32>
    %51 = vector.broadcast %50 : vector<1x128xf32> to vector<8x128xf32>
    %52 = arith.mulf %49, %51 : vector<8x128xf32>
    %c0_29 = arith.constant 0 : index
    %c0_30 = arith.constant 0 : index
    %53 = vector.load %arg9[%c0_29, %c0_30] : memref<1x128xf32, #tpu.memory_space<vmem>>, vector<1x128xf32>
    %54 = vector.broadcast %53 : vector<1x128xf32> to vector<8x128xf32>
    %55 = arith.addf %52, %54 : vector<8x128xf32>
    %cst_31 = arith.constant 5.000000e-01 : f32
    %56 = vector.broadcast %cst_31 : f32 to vector<8x128xf32>
    %57 = arith.mulf %56, %55 : vector<8x128xf32>
    %58 = math.tanh %57 : vector<8x128xf32>
    %cst_32 = arith.constant 5.000000e-01 : f32
    %59 = vector.broadcast %cst_32 : f32 to vector<8x128xf32>
    %60 = arith.mulf %59, %58 : vector<8x128xf32>
    %cst_33 = arith.constant 5.000000e-01 : f32
    %61 = vector.broadcast %cst_33 : f32 to vector<8x128xf32>
    %62 = arith.addf %60, %61 : vector<8x128xf32>
    %63 = arith.mulf %55, %62 : vector<8x128xf32>
    %c0_34 = arith.constant 0 : index
    %c0_35 = arith.constant 0 : index
    %64 = vector.load %arg10[%c0_34, %c0_35] : memref<8x128xf32, #tpu.memory_space<vmem>>, vector<8x128xf32>
    tpu.vector_store %arg10[%c0_34, %c0_35], %63 {strides = array<i32>} : memref<8x128xf32, #tpu.memory_space<vmem>>, vector<8x128xf32>,
    return
  }
  func.func @transform_0(%arg0: i32) -> (i32, i32) {
    %c0_i32 = arith.constant 0 : i32
    %c0_i32_0 = arith.constant 0 : i32
    return %arg0, %c0_i32 : i32, i32
  }
  func.func @transform_1(%arg0: i32) -> (i32, i32) {
    %c0_i32 = arith.constant 0 : i32
    %c0_i32_0 = arith.constant 0 : i32
    return %arg0, %c0_i32 : i32, i32
  }
  func.func @transform_2(%arg0: i32) -> (i32, i32) {
    %c0_i32 = arith.constant 0 : i32
    %c0_i32_0 = arith.constant 0 : i32
    return %arg0, %c0_i32 : i32, i32
  }
  func.func @transform_3(%arg0: i32) -> (i32, i32) {
    %c0_i32 = arith.constant 0 : i32
    %c0_i32_0 = arith.constant 0 : i32
    %c0_i32_1 = arith.constant 0 : i32
    return %c0_i32, %c0_i32_0 : i32, i32
  }
  func.func @transform_4(%arg0: i32) -> (i32, i32) {
    %c0_i32 = arith.constant 0 : i32
    %c0_i32_0 = arith.constant 0 : i32
    %c0_i32_1 = arith.constant 0 : i32
    return %c0_i32, %c0_i32_0 : i32, i32
  }
  func.func @transform_5(%arg0: i32) -> (i32, i32) {
    %c0_i32 = arith.constant 0 : i32
    %c0_i32_0 = arith.constant 0 : i32
    %c0_i32_1 = arith.constant 0 : i32
    return %c0_i32, %c0_i32_0 : i32, i32
  }
  func.func @transform_6(%arg0: i32) -> (i32, i32) {
    %c0_i32 = arith.constant 0 : i32
    %c0_i32_0 = arith.constant 0 : i32
    %c0_i32_1 = arith.constant 0 : i32
    return %c0_i32, %c0_i32_0 : i32, i32
  }
  func.func @transform_7(%arg0: i32) -> (i32, i32) {
    %c0_i32 = arith.constant 0 : i32
    %c0_i32_0 = arith.constant 0 : i32
    %c0_i32_1 = arith.constant 0 : i32
    return %c0_i32, %c0_i32_0 : i32, i32
  }
  func.func @transform_8(%arg0: i32) -> (i32, i32) {
    %c0_i32 = arith.constant 0 : i32
    %c0_i32_0 = arith.constant 0 : i32
    %c0_i32_1 = arith.constant 0 : i32
    return %c0_i32, %c0_i32_0 : i32, i32
  }
  func.func @transform_9(%arg0: i32) -> (i32, i32) {
    %c0_i32 = arith.constant 0 : i32
    %c0_i32_0 = arith.constant 0 : i32
    return %arg0, %c0_i32 : i32, i32
  }
}

</mosaic_0001>

<llo_original>
// kernel: tpu_custom_call.1
$region0: #{tpu_custom_call.1}
  #allocation0 [shape = 'u32[]', space=smem, size = 0x4, offset = 0x4, fixed_abs, tag = 'smem constant byte address 0x4 - core index']
  #allocation1 [shape = 'u32[144,128]{1,0:T(1,128)}', space=vmem, size = 0x12000, scoped, tag = 'internal scratch']
  %s0 = inlined_call_operand.hbm [shape: f32[8,32], index: 0, kind: input, shape index: {}]
  %s1 = inlined_call_operand.hbm [shape: f32[8,16], index: 1, kind: input, shape index: {}]
  %s2 = inlined_call_operand.hbm [shape: f32[8,24], index: 2, kind: input, shape index: {}]
  %s3 = inlined_call_operand.hbm [shape: f32[32,128], index: 3, kind: input, shape index: {}]
  %s4 = inlined_call_operand.hbm [shape: f32[16,128], index: 4, kind: input, shape index: {}]
  %s5 = inlined_call_operand.hbm [shape: f32[24,128], index: 5, kind: input, shape index: {}]
  %s6 = inlined_call_operand.vmem [shape: f32[1,128], index: 6, kind: input, shape index: {}]
  %s7 = inlined_call_operand.vmem [shape: f32[1,128], index: 7, kind: input, shape index: {}]
  %s8 = inlined_call_operand.vmem [shape: f32[1,128], index: 8, kind: input, shape index: {}]
  %s9 = inlined_call_operand.hbm [shape: f32[8,128], index: 9, kind: output, shape index: {}]
  %s10 = sld [smem:[#allocation0]]
  $region70: #{tpu_custom_call.1} parent=0
    _
  %s12 = ssub.s32 1, %s10
  %s13 = scalar_select 0, %s12, %s10
  $region1: #{tpu_custom_call.1} parent=0
    #allocation2 [shape = 'u8[4096]{0}', space=vmem, size = 0x1000, scoped, tag = 'input window, operand 0, single buffered']
    #allocation3 [shape = 's32[1]{0}', space=sflag, size = 0x4, scoped, tag = 'scoped memory for tpu_custom_call.1']
    #allocation4 [shape = 's32[1]{0}', space=sflag, size = 0x4, scoped, tag = 'scoped memory for tpu_custom_call.1']
    #allocation5 [shape = 'u8[4096]{0}', space=vmem, size = 0x1000, scoped, tag = 'input window, operand 1, single buffered']
    #allocation6 [shape = 's32[1]{0}', space=sflag, size = 0x4, scoped, tag = 'scoped memory for tpu_custom_call.1']
    #allocation7 [shape = 'u8[4096]{0}', space=vmem, size = 0x1000, scoped, tag = 'input window, operand 2, single buffered']
    #allocation8 [shape = 'u8[16384]{0}', space=vmem, size = 0x4000, scoped, tag = 'input window, operand 3, single buffered']
    #allocation9 [shape = 's32[1]{0}', space=sflag, size = 0x4, scoped, tag = 'scoped memory for tpu_custom_call.1']
    #allocation10 [shape = 'u8[8192]{0}', space=vmem, size = 0x2000, scoped, tag = 'input window, operand 4, single buffered']
    #allocation11 [shape = 'u8[12288]{0}', space=vmem, size = 0x3000, scoped, tag = 'input window, operand 5, single buffered']
    #allocation12 [shape = 's32[1]{0}', space=sflag, size = 0x4, scoped, tag = 'scoped memory for tpu_custom_call.1']
    #allocation13 [shape = 'u8[4096]{0}', space=vmem, size = 0x1000, scoped, tag = 'output window, operand 0, single buffered']
    %14 = vsyncpa [#allocation3], 0
    %15 = vsyncpa [#allocation6], 0
    %16 = vsyncpa [#allocation9], 0
    %17 = vsyncpa [#allocation12], 0
    %18 = vsyncpa [#allocation4], 0
    // Predicated region
    $region2: #{tpu_custom_call.1} parent=1 // pred_check
      _
    $region3: #{tpu_custom_call.1} parent=1 // pred_check_branch
      %20 = sbr.rel (0) target = $region5
    $region4: #{tpu_custom_call.1} parent=1 // pred_region
      %s22 = ssub.s32 128, 128
      %23 = vsyncadd [#allocation3], %s22
      %s25 = sshll.u32 [#allocation2], 4
      %s26 = int_to_ptr.vmem [resolvable:$true] %s25
      %28 = dma.hbm_to_vmem [thread:$0]  %s0, 128, %s26, [#allocation3]
    $region5: #{tpu_custom_call.1} parent=1 // pred_fallthru
      _
    // Predicated region
    $region6: #{tpu_custom_call.1} parent=1 // pred_check
      _
    $region7: #{tpu_custom_call.1} parent=1 // pred_check_branch
      %30 = sbr.rel (0) target = $region9
    $region8: #{tpu_custom_call.1} parent=1 // pred_region
      %s32 = ssub.s32 128, 128
      %33 = vsyncadd [#allocation6], %s32
      %s35 = sshll.u32 [#allocation5], 4
      %s36 = int_to_ptr.vmem [resolvable:$true] %s35
      %38 = dma.hbm_to_vmem [thread:$0]  %s1, 128, %s36, [#allocation6]
    $region9: #{tpu_custom_call.1} parent=1 // pred_fallthru
      _
    // Predicated region
    $region10: #{tpu_custom_call.1} parent=1 // pred_check
      _
    $region11: #{tpu_custom_call.1} parent=1 // pred_check_branch
      %40 = sbr.rel (0) target = $region13
    $region12: #{tpu_custom_call.1} parent=1 // pred_region
      %s42 = ssub.s32 128, 128
      %43 = vsyncadd [#allocation6], %s42
      %s45 = sshll.u32 [#allocation7], 4
      %s46 = int_to_ptr.vmem [resolvable:$true] %s45
      %48 = dma.hbm_to_vmem [thread:$0]  %s2, 128, %s46, [#allocation6]
    $region13: #{tpu_custom_call.1} parent=1 // pred_fallthru
      _
    // Predicated region
    $region14: #{tpu_custom_call.1} parent=1 // pred_check
      _
    $region15: #{tpu_custom_call.1} parent=1 // pred_check_branch
      %50 = sbr.rel (0) target = $region17
    $region16: #{tpu_custom_call.1} parent=1 // pred_region
      %s52 = ssub.s32 512, 512
      %53 = vsyncadd [#allocation9], %s52
      %s54 = sshll.u32 [#allocation8], 4
      %s55 = int_to_ptr.vmem [resolvable:$true] %s54
      %60 = dma.hbm_to_vmem [thread:$0]  %s3, 512, %s55, [#allocation9], 128, 128, 8
    $region17: #{tpu_custom_call.1} parent=1 // pred_fallthru
      _
    // Predicated region
    $region18: #{tpu_custom_call.1} parent=1 // pred_check
      _
    $region19: #{tpu_custom_call.1} parent=1 // pred_check_branch
      %62 = sbr.rel (0) target = $region21
    $region20: #{tpu_custom_call.1} parent=1 // pred_region
      %s64 = ssub.s32 256, 256
      %65 = vsyncadd [#allocation9], %s64
      %s66 = sshll.u32 [#allocation10], 4
      %s67 = int_to_ptr.vmem [resolvable:$true] %s66
      %72 = dma.hbm_to_vmem [thread:$0]  %s4, 256, %s67, [#allocation9], 128, 128, 8
    $region21: #{tpu_custom_call.1} parent=1 // pred_fallthru
      _
    // Predicated region
    $region22: #{tpu_custom_call.1} parent=1 // pred_check
      _
    $region23: #{tpu_custom_call.1} parent=1 // pred_check_branch
      %74 = sbr.rel (0) target = $region25
    $region24: #{tpu_custom_call.1} parent=1 // pred_region
      %s76 = ssub.s32 384, 384
      %77 = vsyncadd [#allocation12], %s76
      %s78 = sshll.u32 [#allocation11], 4
      %s79 = int_to_ptr.vmem [resolvable:$true] %s78
      %84 = dma.hbm_to_vmem [thread:$0]  %s5, 384, %s79, [#allocation12], 128, 128, 8
    $region25: #{tpu_custom_call.1} parent=1 // pred_fallthru
      _
    // Predicated region
    $region26: #{tpu_custom_call.1} parent=1 // pred_check
      _
    $region27: #{tpu_custom_call.1} parent=1 // pred_check_branch
      %86 = sbr.rel (0) target = $region29
    $region28: #{tpu_custom_call.1} parent=1 // pred_region
      _
    $region29: #{tpu_custom_call.1} parent=1 // pred_fallthru
      _
    // Predicated region
    $region30: #{tpu_custom_call.1} parent=1 // pred_check
      _
    $region31: #{tpu_custom_call.1} parent=1 // pred_check_branch
      %88 = sbr.rel (0) target = $region33
    $region32: #{tpu_custom_call.1} parent=1 // pred_region
      _
    $region33: #{tpu_custom_call.1} parent=1 // pred_fallthru
      _
    // Predicated region
    $region34: #{tpu_custom_call.1} parent=1 // pred_check
      _
    $region35: #{tpu_custom_call.1} parent=1 // pred_check_branch
      %90 = sbr.rel (0) target = $region37
    $region36: #{tpu_custom_call.1} parent=1 // pred_region
      _
    $region37: #{tpu_custom_call.1} parent=1 // pred_fallthru
      _
    // Predicated region
    $region38: #{tpu_custom_call.1} parent=1 // pred_check
      _
    $region39: #{tpu_custom_call.1} parent=1 // pred_check_branch
      %92 = sbr.rel (0) target = $region41
    $region40: #{tpu_custom_call.1} parent=1 // pred_region
      %93 = dma.done [#allocation3], 128
    $region41: #{tpu_custom_call.1} parent=1 // pred_fallthru
      _
    // Predicated region
    $region42: #{tpu_custom_call.1} parent=1 // pred_check
      _
    $region43: #{tpu_custom_call.1} parent=1 // pred_check_branch
      %95 = sbr.rel (0) target = $region45
    $region44: #{tpu_custom_call.1} parent=1 // pred_region
      %96 = dma.done [#allocation6], 128
    $region45: #{tpu_custom_call.1} parent=1 // pred_fallthru
      _
    // Predicated region
    $region46: #{tpu_custom_call.1} parent=1 // pred_check
      _
    $region47: #{tpu_custom_call.1} parent=1 // pred_check_branch
      %98 = sbr.rel (0) target = $region49
    $region48: #{tpu_custom_call.1} parent=1 // pred_region
      %99 = dma.done [#allocation6], 128
    $region49: #{tpu_custom_call.1} parent=1 // pred_fallthru
      _
    // Predicated region
    $region50: #{tpu_custom_call.1} parent=1 // pred_check
      _
    $region51: #{tpu_custom_call.1} parent=1 // pred_check_branch
      %101 = sbr.rel (0) target = $region53
    $region52: #{tpu_custom_call.1} parent=1 // pred_region
      %102 = dma.done [#allocation9], 512
    $region53: #{tpu_custom_call.1} parent=1 // pred_fallthru
      _
    // Predicated region
    $region54: #{tpu_custom_call.1} parent=1 // pred_check
      _
    $region55: #{tpu_custom_call.1} parent=1 // pred_check_branch
      %104 = sbr.rel (0) target = $region57
    $region56: #{tpu_custom_call.1} parent=1 // pred_region
      %105 = dma.done [#allocation9], 256
    $region57: #{tpu_custom_call.1} parent=1 // pred_fallthru
      _
    // Predicated region
    $region58: #{tpu_custom_call.1} parent=1 // pred_check
      _
    $region59: #{tpu_custom_call.1} parent=1 // pred_check_branch
      %107 = sbr.rel (0) target = $region61
    $region60: #{tpu_custom_call.1} parent=1 // pred_region
      %108 = dma.done [#allocation12], 384
    $region61: #{tpu_custom_call.1} parent=1 // pred_fallthru
      _
    %v109 = vld [vmem:[#allocation2] sm:$0xff]
    %v110 = vld [vmem:[#allocation8] sm:$0xff]
    %v111 = vld [vmem:[#allocation8 + $0x8] sm:$0xff]
    %v112 = vld [vmem:[#allocation8 + $0x10] sm:$0xff]
    %v113 = vld [vmem:[#allocation8 + $0x18] sm:$0xff]
    %v114 = vld [vmem:[#allocation5] sm:$0xff]
    %v115 = vmul.f32 %v114, 0.5
    %v116 = vtanh.pop %v115
    %v117 = vmul.f32 %v116, 0.5
    %v118 = vadd.f32 %v117, 0.5
    %v119 = vmul.f32 %v114, %v118
    %v120 = vld [vmem:[#allocation10] sm:$0xff]
    %v121 = vld [vmem:[#allocation10 + $0x8] sm:$0xff]
    %vm122 = vcmask 130048
    %v124 = vsel %vm122, %v119, 0
    %126 = vmatprep.subr.mxu0 0.0
    %127 = vmatpush1.msra.mxu0 0.0
    %128 = vmatprep.subr.mxu0 0.0
    %129 = vmatpush1.msra.mxu0 0.0
    %130 = vmatprep.subr.mxu0 0.0
    %131 = vmatpush1.msra.mxu0 0.0
    %132 = vmatprep.subr.mxu0 0.0
    %133 = vmatpush1.msra.mxu0 0.0
    %134 = vmatprep.subr.mxu0 0.0
    %135 = vmatpush1.msra.mxu0 0.0
    %136 = vmatprep.subr.mxu0 0.0
    %137 = vmatpush1.msra.mxu0 0.0
    %138 = vmatprep.subr.mxu0 0.0
    %139 = vmatpush1.msra.mxu0 0.0
    %140 = vmatprep.subr.mxu0 0.0
    %141 = vmatpush1.msra.mxu0 0.0
    %142 = vmatprep.subr.mxu0 0.0
    %143 = vmatpush1.msra.mxu0 0.0
    %144 = vmatprep.subr.mxu0 0.0
    %145 = vmatpush1.msra.mxu0 0.0
    %146 = vmatprep.subr.mxu0 0.0
    %147 = vmatpush1.msra.mxu0 0.0
    %148 = vmatprep.subr.mxu0 0.0
    %149 = vmatpush1.msra.mxu0 0.0
    %150 = vmatprep.subr.mxu0 0.0
    %151 = vmatpush1.msra.mxu0 0.0
    %152 = vmatprep.subr.mxu0 0.0
    %153 = vmatpush1.msra.mxu0 0.0
    %154 = vmatprep.subr.mxu0 0.0
    %155 = vmatpush1.msra.mxu0 %v121
    %156 = vmatprep.subr.mxu0 0.0
    %157 = vmatpush1.msra.mxu0 %v120
    %158 = vmatprep.subr.mxu0 0.0
    %159 = vmatpush2.msra.mxu0 0.0
    %160 = vmatprep.subr.mxu0 0.0
    %161 = vmatpush2.msra.mxu0 0.0
    %162 = vmatprep.subr.mxu0 0.0
    %163 = vmatpush2.msra.mxu0 0.0
    %164 = vmatprep.subr.mxu0 0.0
    %165 = vmatpush2.msra.mxu0 0.0
    %166 = vmatprep.subr.mxu0 0.0
    %167 = vmatpush2.msra.mxu0 0.0
    %168 = vmatprep.subr.mxu0 0.0
    %169 = vmatpush2.msra.mxu0 0.0
    %170 = vmatprep.subr.mxu0 0.0
    %171 = vmatpush2.msra.mxu0 0.0
    %172 = vmatprep.subr.mxu0 0.0
    %173 = vmatpush2.msra.mxu0 0.0
    %174 = vmatprep.subr.mxu0 0.0
    %175 = vmatpush2.msra.mxu0 0.0
    %176 = vmatprep.subr.mxu0 0.0
    %177 = vmatpush2.msra.mxu0 0.0
    %178 = vmatprep.subr.mxu0 0.0
    %179 = vmatpush2.msra.mxu0 0.0
    %180 = vmatprep.subr.mxu0 0.0
    %181 = vmatpush2.msra.mxu0 0.0
    %182 = vmatprep.subr.mxu0 0.0
    %183 = vmatpush2.msra.mxu0 0.0
    %184 = vmatprep.subr.mxu0 0.0
    %185 = vmatpush2.msra.mxu0 0.0
    %186 = vmatprep.subr.mxu0 0.0
    %187 = vmatpush2.msra.mxu0 0.0
    %188 = vmatprep.subr.mxu0 0.0
    %189 = vmatpush2.msra.mxu0 0.0
    %190 = vmatprep.mubr.f32.mxu0 0.0
    %191 = vmatmul.mubr.f32.gmra.mxu0 %v124
    %v192 = vpop.f32.mrf.mxu0
    %v193 = vadd.f32 0.0, %v192
    %v194 = vpop.f32.mrf.mxu0
    %195 = vdwg.mxu0
    %vm196 = vcmask 261120
    %v198 = vsel %vm196, %v109, 0
    %200 = vmatprep.subr.mxu0 0.0
    %201 = vmatpush1.msra.mxu0 0.0
    %202 = vmatprep.subr.mxu0 0.0
    %203 = vmatpush1.msra.mxu0 0.0
    %204 = vmatprep.subr.mxu0 0.0
    %205 = vmatpush1.msra.mxu0 0.0
    %206 = vmatprep.subr.mxu0 0.0
    %207 = vmatpush1.msra.mxu0 0.0
    %208 = vmatprep.subr.mxu0 0.0
    %209 = vmatpush1.msra.mxu0 0.0
    %210 = vmatprep.subr.mxu0 0.0
    %211 = vmatpush1.msra.mxu0 0.0
    %212 = vmatprep.subr.mxu0 0.0
    %213 = vmatpush1.msra.mxu0 0.0
    %214 = vmatprep.subr.mxu0 0.0
    %215 = vmatpush1.msra.mxu0 0.0
    %216 = vmatprep.subr.mxu0 0.0
    %217 = vmatpush1.msra.mxu0 0.0
    %218 = vmatprep.subr.mxu0 0.0
    %219 = vmatpush1.msra.mxu0 0.0
    %220 = vmatprep.subr.mxu0 0.0
    %221 = vmatpush1.msra.mxu0 0.0
    %222 = vmatprep.subr.mxu0 0.0
    %223 = vmatpush1.msra.mxu0 0.0
    %224 = vmatprep.subr.mxu0 0.0
    %225 = vmatpush1.msra.mxu0 %v113
    %226 = vmatprep.subr.mxu0 0.0
    %227 = vmatpush1.msra.mxu0 %v112
    %228 = vmatprep.subr.mxu0 0.0
    %229 = vmatpush1.msra.mxu0 %v111
    %230 = vmatprep.subr.mxu0 0.0
    %231 = vmatpush1.msra.mxu0 %v110
    %232 = vmatprep.subr.mxu0 0.0
    %233 = vmatpush2.msra.mxu0 0.0
    %234 = vmatprep.subr.mxu0 0.0
    %235 = vmatpush2.msra.mxu0 0.0
    %236 = vmatprep.subr.mxu0 0.0
    %237 = vmatpush2.msra.mxu0 0.0
    %238 = vmatprep.subr.mxu0 0.0
    %239 = vmatpush2.msra.mxu0 0.0
    %240 = vmatprep.subr.mxu0 0.0
    %241 = vmatpush2.msra.mxu0 0.0
    %242 = vmatprep.subr.mxu0 0.0
    %243 = vmatpush2.msra.mxu0 0.0
    %244 = vmatprep.subr.mxu0 0.0
    %245 = vmatpush2.msra.mxu0 0.0
    %246 = vmatprep.subr.mxu0 0.0
    %247 = vmatpush2.msra.mxu0 0.0
    %248 = vmatprep.subr.mxu0 0.0
    %249 = vmatpush2.msra.mxu0 0.0
    %250 = vmatprep.subr.mxu0 0.0
    %251 = vmatpush2.msra.mxu0 0.0
    %252 = vmatprep.subr.mxu0 0.0
    %253 = vmatpush2.msra.mxu0 0.0
    %254 = vmatprep.subr.mxu0 0.0
    %255 = vmatpush2.msra.mxu0 0.0
    %256 = vmatprep.subr.mxu0 0.0
    %257 = vmatpush2.msra.mxu0 0.0
    %258 = vmatprep.subr.mxu0 0.0
    %259 = vmatpush2.msra.mxu0 0.0
    %260 = vmatprep.subr.mxu0 0.0
    %261 = vmatpush2.msra.mxu0 0.0
    %262 = vmatprep.subr.mxu0 0.0
    %263 = vmatpush2.msra.mxu0 0.0
    %264 = vmatprep.mubr.f32.mxu0 0.0
    %265 = vmatmul.mubr.f32.gmra.mxu0 %v198
    %v266 = vpop.f32.mrf.mxu0
    %v267 = vadd.f32 %v193, %v266
    %v268 = vpop.f32.mrf.mxu0
    %269 = vdwg.mxu0
    %v270 = vld [vmem:[#allocation7] sm:$0xff]
    %v271 = vmul.f32 %v270, 0.5
    %v272 = vtanh.pop %v271
    %v273 = vmul.f32 %v272, 0.5
    %v274 = vadd.f32 %v273, 0.5
    %v275 = vmul.f32 %v270, %v274
    %v276 = vld [vmem:[#allocation11] sm:$0xff]
    %v277 = vld [vmem:[#allocation11 + $0x8] sm:$0xff]
    %v278 = vld [vmem:[#allocation11 + $0x10] sm:$0xff]
    %vm279 = vcmask 195584
    %v281 = vsel %vm279, %v275, 0
    %283 = vmatprep.subr.mxu0 0.0
    %284 = vmatpush1.msra.mxu0 0.0
    %285 = vmatprep.subr.mxu0 0.0
    %286 = vmatpush1.msra.mxu0 0.0
    %287 = vmatprep.subr.mxu0 0.0
    %288 = vmatpush1.msra.mxu0 0.0
    %289 = vmatprep.subr.mxu0 0.0
    %290 = vmatpush1.msra.mxu0 0.0
    %291 = vmatprep.subr.mxu0 0.0
    %292 = vmatpush1.msra.mxu0 0.0
    %293 = vmatprep.subr.mxu0 0.0
    %294 = vmatpush1.msra.mxu0 0.0
    %295 = vmatprep.subr.mxu0 0.0
    %296 = vmatpush1.msra.mxu0 0.0
    %297 = vmatprep.subr.mxu0 0.0
    %298 = vmatpush1.msra.mxu0 0.0
    %299 = vmatprep.subr.mxu0 0.0
    %300 = vmatpush1.msra.mxu0 0.0
    %301 = vmatprep.subr.mxu0 0.0
    %302 = vmatpush1.msra.mxu0 0.0
    %303 = vmatprep.subr.mxu0 0.0
    %304 = vmatpush1.msra.mxu0 0.0
    %305 = vmatprep.subr.mxu0 0.0
    %306 = vmatpush1.msra.mxu0 0.0
    %307 = vmatprep.subr.mxu0 0.0
    %308 = vmatpush1.msra.mxu0 0.0
    %309 = vmatprep.subr.mxu0 0.0
    %310 = vmatpush1.msra.mxu0 %v278
    %311 = vmatprep.subr.mxu0 0.0
    %312 = vmatpush1.msra.mxu0 %v277
    %313 = vmatprep.subr.mxu0 0.0
    %314 = vmatpush1.msra.mxu0 %v276
    %315 = vmatprep.subr.mxu0 0.0
    %316 = vmatpush2.msra.mxu0 0.0
    %317 = vmatprep.subr.mxu0 0.0
    %318 = vmatpush2.msra.mxu0 0.0
    %319 = vmatprep.subr.mxu0 0.0
    %320 = vmatpush2.msra.mxu0 0.0
    %321 = vmatprep.subr.mxu0 0.0
    %322 = vmatpush2.msra.mxu0 0.0
    %323 = vmatprep.subr.mxu0 0.0
    %324 = vmatpush2.msra.mxu0 0.0
    %325 = vmatprep.subr.mxu0 0.0
    %326 = vmatpush2.msra.mxu0 0.0
    %327 = vmatprep.subr.mxu0 0.0
    %328 = vmatpush2.msra.mxu0 0.0
    %329 = vmatprep.subr.mxu0 0.0
    %330 = vmatpush2.msra.mxu0 0.0
    %331 = vmatprep.subr.mxu0 0.0
    %332 = vmatpush2.msra.mxu0 0.0
    %333 = vmatprep.subr.mxu0 0.0
    %334 = vmatpush2.msra.mxu0 0.0
    %335 = vmatprep.subr.mxu0 0.0
    %336 = vmatpush2.msra.mxu0 0.0
    %337 = vmatprep.subr.mxu0 0.0
    %338 = vmatpush2.msra.mxu0 0.0
    %339 = vmatprep.subr.mxu0 0.0
    %340 = vmatpush2.msra.mxu0 0.0
    %341 = vmatprep.subr.mxu0 0.0
    %342 = vmatpush2.msra.mxu0 0.0
    %343 = vmatprep.subr.mxu0 0.0
    %344 = vmatpush2.msra.mxu0 0.0
    %345 = vmatprep.subr.mxu0 0.0
    %346 = vmatpush2.msra.mxu0 0.0
    %347 = vmatprep.mubr.f32.mxu0 0.0
    %348 = vmatmul.mubr.f32.gmra.mxu0 %v281
    %v349 = vpop.f32.mrf.mxu0
    %v350 = vadd.f32 0.0, %v349
    %v351 = vpop.f32.mrf.mxu0
    %352 = vdwg.mxu0
    %v353 = vadd.f32 %v267, %v350
    %v354 = vld [vmem:[%s6] sm:$0x1]
    %v356 = vlaneseq
    %v357 = vshrl.u32 %v356, 7
    %v358 = vsub.s32 0, %v357
    %v359 = vrot.slane %v354, %v358
    %v361 = vadd.f32 %v353, %v359
    %362 = vadd.xlane.f32.xlu0 %v361
    %v363 = vpop.xlane.xlu0 %362
    %v364 = vmul.f32 %v363, 0.015625
    %v365 = vmul.f32 %v361, %v361
    %366 = vadd.xlane.f32.xlu0 %v365
    %v367 = vpop.xlane.xlu0 %366
    %v368 = vmul.f32 %v367, 0.015625
    %v369 = vmul.f32 %v364, %v364
    %v370 = vsub.f32 %v368, %v369
    %v371 = vmax.f32 %v370, 0.0
    %v372 = vsub.f32 %v361, %v364
    %v373 = vadd.f32 %v371, 1e-05
    %v374 = vrsqrt.pop %v373
    %v375 = vmul.f32 %v372, %v374
    %v376 = vld [vmem:[%s7] sm:$0x1]
    %v378 = vlaneseq
    %v379 = vshrl.u32 %v378, 7
    %v380 = vsub.s32 0, %v379
    %v381 = vrot.slane %v376, %v380
    %v383 = vmul.f32 %v375, %v381
    %v384 = vld [vmem:[%s8] sm:$0x1]
    %v386 = vlaneseq
    %v387 = vshrl.u32 %v386, 7
    %v388 = vsub.s32 0, %v387
    %v389 = vrot.slane %v384, %v388
    %v391 = vadd.f32 %v383, %v389
    %v392 = vmul.f32 %v391, 0.5
    %v393 = vtanh.pop %v392
    %v394 = vmul.f32 %v393, 0.5
    %v395 = vadd.f32 %v394, 0.5
    %v396 = vmul.f32 %v391, %v395
    %397 = vst [vmem:[#allocation13] sm:$0xff] %v396
    // Predicated region
    $region62: #{tpu_custom_call.1} parent=1 // pred_check
      _
    $region63: #{tpu_custom_call.1} parent=1 // pred_check_branch
      %399 = sbr.rel (0) target = $region65
    $region64: #{tpu_custom_call.1} parent=1 // pred_region
      %s401 = ssub.s32 128, 128
      %402 = vsyncadd [#allocation4], %s401
      %s404 = sshll.u32 [#allocation13], 4
      %s405 = int_to_ptr.vmem [resolvable:$true] %s404
      %407 = dma.vmem_to_hbm [thread:$0]  %s405, 128, %s9, [#allocation4]
    $region65: #{tpu_custom_call.1} parent=1 // pred_fallthru
      _
    // Predicated region
    $region66: #{tpu_custom_call.1} parent=1 // pred_check
      _
    $region67: #{tpu_custom_call.1} parent=1 // pred_check_branch
      %409 = sbr.rel (0) target = $region69
    $region68: #{tpu_custom_call.1} parent=1 // pred_region
      %410 = dma.done [#allocation4], 128
    $region69: #{tpu_custom_call.1} parent=1 // pred_fallthru
      _
    %411 = vsyncpa [#allocation3], 1
    %412 = vsyncpa [#allocation6], 1
    %413 = vsyncpa [#allocation9], 1
    %414 = vsyncpa [#allocation12], 1
    %415 = vsyncpa [#allocation4], 1

// kernel: tpu_custom_call.1
$region0: #{tpu_custom_call.1}
  #allocation0 [shape = 'u32[]', space=smem, size = 0x4, offset = 0x4, fixed_abs, tag = 'smem constant byte address 0x4 - core index']
  #allocation1 [shape = 'u32[144,128]{1,0:T(1,128)}', space=vmem, size = 0x12000, scoped, tag = 'internal scratch']
  %s0 = inlined_call_operand.hbm [shape: f32[8,32], index: 0, kind: input, shape index: {}]
  %s1 = inlined_call_operand.hbm [shape: f32[8,16], index: 1, kind: input, shape index: {}]
  %s2 = inlined_call_operand.hbm [shape: f32[8,24], index: 2, kind: input, shape index: {}]
  %s3 = inlined_call_operand.hbm [shape: f32[32,128], index: 3, kind: input, shape index: {}]
  %s4 = inlined_call_operand.hbm [shape: f32[16,128], index: 4, kind: input, shape index: {}]
  %s5 = inlined_call_operand.hbm [shape: f32[24,128], index: 5, kind: input, shape index: {}]
  %s6 = inlined_call_operand.vmem [shape: f32[1,128], index: 6, kind: input, shape index: {}]
  %s7 = inlined_call_operand.vmem [shape: f32[1,128], index: 7, kind: input, shape index: {}]
  %s8 = inlined_call_operand.vmem [shape: f32[1,128], index: 8, kind: input, shape index: {}]
  %s9 = inlined_call_operand.hbm [shape: f32[8,128], index: 9, kind: output, shape index: {}]
  %s10 = sld [smem:[#allocation0]]
  $region70: #{tpu_custom_call.1} parent=0
    _
  %s12 = ssub.s32 1, %s10
  %s13 = scalar_select 0, %s12, %s10
  $region1: #{tpu_custom_call.1} parent=0
    #allocation2 [shape = 'u8[4096]{0}', space=vmem, size = 0x1000, scoped, tag = 'input window, operand 0, single buffered']
    #allocation3 [shape = 's32[1]{0}', space=sflag, size = 0x4, scoped, tag = 'scoped memory for tpu_custom_call.1']
    #allocation4 [shape = 's32[1]{0}', space=sflag, size = 0x4, scoped, tag = 'scoped memory for tpu_custom_call.1']
    #allocation5 [shape = 'u8[4096]{0}', space=vmem, size = 0x1000, scoped, tag = 'input window, operand 1, single buffered']
    #allocation6 [shape = 's32[1]{0}', space=sflag, size = 0x4, scoped, tag = 'scoped memory for tpu_custom_call.1']
    #allocation7 [shape = 'u8[4096]{0}', space=vmem, size = 0x1000, scoped, tag = 'input window, operand 2, single buffered']
    #allocation8 [shape = 'u8[16384]{0}', space=vmem, size = 0x4000, scoped, tag = 'input window, operand 3, single buffered']
    #allocation9 [shape = 's32[1]{0}', space=sflag, size = 0x4, scoped, tag = 'scoped memory for tpu_custom_call.1']
    #allocation10 [shape = 'u8[8192]{0}', space=vmem, size = 0x2000, scoped, tag = 'input window, operand 4, single buffered']
    #allocation11 [shape = 'u8[12288]{0}', space=vmem, size = 0x3000, scoped, tag = 'input window, operand 5, single buffered']
    #allocation12 [shape = 's32[1]{0}', space=sflag, size = 0x4, scoped, tag = 'scoped memory for tpu_custom_call.1']
    #allocation13 [shape = 'u8[4096]{0}', space=vmem, size = 0x1000, scoped, tag = 'output window, operand 0, single buffered']
    %14 = vsyncpa [#allocation3], 0
    %15 = vsyncpa [#allocation6], 0
    %16 = vsyncpa [#allocation9], 0
    %17 = vsyncpa [#allocation12], 0
    %18 = vsyncpa [#allocation4], 0
    // Predicated region
    $region2: #{tpu_custom_call.1} parent=1 // pred_check
      _
    $region3: #{tpu_custom_call.1} parent=1 // pred_check_branch
      %20 = sbr.rel (0) target = $region5
    $region4: #{tpu_custom_call.1} parent=1 // pred_region
      %s22 = ssub.s32 128, 128
      %23 = vsyncadd [#allocation3], %s22
      %s25 = sshll.u32 [#allocation2], 4
      %s26 = int_to_ptr.vmem [resolvable:$true] %s25
      %28 = dma.hbm_to_vmem [thread:$0]  %s0, 128, %s26, [#allocation3]
    $region5: #{tpu_custom_call.1} parent=1 // pred_fallthru
      _
    // Predicated region
    $region6: #{tpu_custom_call.1} parent=1 // pred_check
      _
    $region7: #{tpu_custom_call.1} parent=1 // pred_check_branch
      %30 = sbr.rel (0) target = $region9
    $region8: #{tpu_custom_call.1} parent=1 // pred_region
      %s32 = ssub.s32 128, 128
      %33 = vsyncadd [#allocation6], %s32
      %s35 = sshll.u32 [#allocation5], 4
      %s36 = int_to_ptr.vmem [resolvable:$true] %s35
      %38 = dma.hbm_to_vmem [thread:$0]  %s1, 128, %s36, [#allocation6]
    $region9: #{tpu_custom_call.1} parent=1 // pred_fallthru
      _
    // Predicated region
    $region10: #{tpu_custom_call.1} parent=1 // pred_check
      _
    $region11: #{tpu_custom_call.1} parent=1 // pred_check_branch
      %40 = sbr.rel (0) target = $region13
    $region12: #{tpu_custom_call.1} parent=1 // pred_region
      %s42 = ssub.s32 128, 128
      %43 = vsyncadd [#allocation6], %s42
      %s45 = sshll.u32 [#allocation7], 4
      %s46 = int_to_ptr.vmem [resolvable:$true] %s45
      %48 = dma.hbm_to_vmem [thread:$0]  %s2, 128, %s46, [#allocation6]
    $region13: #{tpu_custom_call.1} parent=1 // pred_fallthru
      _
    // Predicated region
    $region14: #{tpu_custom_call.1} parent=1 // pred_check
      _
    $region15: #{tpu_custom_call.1} parent=1 // pred_check_branch
      %50 = sbr.rel (0) target = $region17
    $region16: #{tpu_custom_call.1} parent=1 // pred_region
      %s52 = ssub.s32 512, 512
      %53 = vsyncadd [#allocation9], %s52
      %s54 = sshll.u32 [#allocation8], 4
      %s55 = int_to_ptr.vmem [resolvable:$true] %s54
      %60 = dma.hbm_to_vmem [thread:$0]  %s3, 512, %s55, [#allocation9], 128, 128, 8
    $region17: #{tpu_custom_call.1} parent=1 // pred_fallthru
      _
    // Predicated region
    $region18: #{tpu_custom_call.1} parent=1 // pred_check
      _
    $region19: #{tpu_custom_call.1} parent=1 // pred_check_branch
      %62 = sbr.rel (0) target = $region21
    $region20: #{tpu_custom_call.1} parent=1 // pred_region
      %s64 = ssub.s32 256, 256
      %65 = vsyncadd [#allocation9], %s64
      %s66 = sshll.u32 [#allocation10], 4
      %s67 = int_to_ptr.vmem [resolvable:$true] %s66
      %72 = dma.hbm_to_vmem [thread:$0]  %s4, 256, %s67, [#allocation9], 128, 128, 8
    $region21: #{tpu_custom_call.1} parent=1 // pred_fallthru
      _
    // Predicated region
    $region22: #{tpu_custom_call.1} parent=1 // pred_check
      _
    $region23: #{tpu_custom_call.1} parent=1 // pred_check_branch
      %74 = sbr.rel (0) target = $region25
    $region24: #{tpu_custom_call.1} parent=1 // pred_region
      %s76 = ssub.s32 384, 384
      %77 = vsyncadd [#allocation12], %s76
      %s78 = sshll.u32 [#allocation11], 4
      %s79 = int_to_ptr.vmem [resolvable:$true] %s78
      %84 = dma.hbm_to_vmem [thread:$0]  %s5, 384, %s79, [#allocation12], 128, 128, 8
    $region25: #{tpu_custom_call.1} parent=1 // pred_fallthru
      _
    // Predicated region
    $region26: #{tpu_custom_call.1} parent=1 // pred_check
      _
    $region27: #{tpu_custom_call.1} parent=1 // pred_check_branch
      %86 = sbr.rel (0) target = $region29
    $region28: #{tpu_custom_call.1} parent=1 // pred_region
      _
    $region29: #{tpu_custom_call.1} parent=1 // pred_fallthru
      _
    // Predicated region
    $region30: #{tpu_custom_call.1} parent=1 // pred_check
      _
    $region31: #{tpu_custom_call.1} parent=1 // pred_check_branch
      %88 = sbr.rel (0) target = $region33
    $region32: #{tpu_custom_call.1} parent=1 // pred_region
      _
    $region33: #{tpu_custom_call.1} parent=1 // pred_fallthru
      _
    // Predicated region
    $region34: #{tpu_custom_call.1} parent=1 // pred_check
      _
    $region35: #{tpu_custom_call.1} parent=1 // pred_check_branch
      %90 = sbr.rel (0) target = $region37
    $region36: #{tpu_custom_call.1} parent=1 // pred_region
      _
    $region37: #{tpu_custom_call.1} parent=1 // pred_fallthru
      _
    // Predicated region
    $region38: #{tpu_custom_call.1} parent=1 // pred_check
      _
    $region39: #{tpu_custom_call.1} parent=1 // pred_check_branch
      %92 = sbr.rel (0) target = $region41
    $region40: #{tpu_custom_call.1} parent=1 // pred_region
      %93 = dma.done [#allocation3], 128
    $region41: #{tpu_custom_call.1} parent=1 // pred_fallthru
      _
    // Predicated region
    $region42: #{tpu_custom_call.1} parent=1 // pred_check
      _
    $region43: #{tpu_custom_call.1} parent=1 // pred_check_branch
      %95 = sbr.rel (0) target = $region45
    $region44: #{tpu_custom_call.1} parent=1 // pred_region
      %96 = dma.done [#allocation6], 128
    $region45: #{tpu_custom_call.1} parent=1 // pred_fallthru
      _
    // Predicated region
    $region46: #{tpu_custom_call.1} parent=1 // pred_check
      _
    $region47: #{tpu_custom_call.1} parent=1 // pred_check_branch
      %98 = sbr.rel (0) target = $region49
    $region48: #{tpu_custom_call.1} parent=1 // pred_region
      %99 = dma.done [#allocation6], 128
    $region49: #{tpu_custom_call.1} parent=1 // pred_fallthru
      _
    // Predicated region
    $region50: #{tpu_custom_call.1} parent=1 // pred_check
      _
    $region51: #{tpu_custom_call.1} parent=1 // pred_check_branch
      %101 = sbr.rel (0) target = $region53
    $region52: #{tpu_custom_call.1} parent=1 // pred_region
      %102 = dma.done [#allocation9], 512
    $region53: #{tpu_custom_call.1} parent=1 // pred_fallthru
      _
    // Predicated region
    $region54: #{tpu_custom_call.1} parent=1 // pred_check
      _
    $region55: #{tpu_custom_call.1} parent=1 // pred_check_branch
      %104 = sbr.rel (0) target = $region57
    $region56: #{tpu_custom_call.1} parent=1 // pred_region
      %105 = dma.done [#allocation9], 256
    $region57: #{tpu_custom_call.1} parent=1 // pred_fallthru
      _
    // Predicated region
    $region58: #{tpu_custom_call.1} parent=1 // pred_check
      _
    $region59: #{tpu_custom_call.1} parent=1 // pred_check_branch
      %107 = sbr.rel (0) target = $region61
    $region60: #{tpu_custom_call.1} parent=1 // pred_region
      %108 = dma.done [#allocation12], 384
    $region61: #{tpu_custom_call.1} parent=1 // pred_fallthru
      _
    %v109 = vld [vmem:[#allocation2] sm:$0xff]
    %v110 = vld [vmem:[#allocation8] sm:$0xff]
    %v111 = vld [vmem:[#allocation8 + $0x8] sm:$0xff]
    %v112 = vld [vmem:[#allocation8 + $0x10] sm:$0xff]
    %v113 = vld [vmem:[#allocation8 + $0x18] sm:$0xff]
    %v114 = vld [vmem:[#allocation5] sm:$0xff]
    %v115 = vmul.f32 %v114, 0.5
    %v116 = vtanh.pop %v115
    %v117 = vmul.f32 %v116, 0.5
    %v118 = vadd.f32 %v117, 0.5
    %v119 = vmul.f32 %v114, %v118
    %v120 = vld [vmem:[#allocation10] sm:$0xff]
    %v121 = vld [vmem:[#allocation10 + $0x8] sm:$0xff]
    %vm122 = vcmask 130048
    %v124 = vsel %vm122, %v119, 0
    %126 = vmatprep.subr.mxu0 0.0
    %127 = vmatpush1.msra.mxu0 0.0
    %128 = vmatprep.subr.mxu0 0.0
    %129 = vmatpush1.msra.mxu0 0.0
    %130 = vmatprep.subr.mxu0 0.0
    %131 = vmatpush1.msra.mxu0 0.0
    %132 = vmatprep.subr.mxu0 0.0
    %133 = vmatpush1.msra.mxu0 0.0
    %134 = vmatprep.subr.mxu0 0.0
    %135 = vmatpush1.msra.mxu0 0.0
    %136 = vmatprep.subr.mxu0 0.0
    %137 = vmatpush1.msra.mxu0 0.0
    %138 = vmatprep.subr.mxu0 0.0
    %139 = vmatpush1.msra.mxu0 0.0
    %140 = vmatprep.subr.mxu0 0.0
    %141 = vmatpush1.msra.mxu0 0.0
    %142 = vmatprep.subr.mxu0 0.0
    %143 = vmatpush1.msra.mxu0 0.0
    %144 = vmatprep.subr.mxu0 0.0
    %145 = vmatpush1.msra.mxu0 0.0
    %146 = vmatprep.subr.mxu0 0.0
    %147 = vmatpush1.msra.mxu0 0.0
    %148 = vmatprep.subr.mxu0 0.0
    %149 = vmatpush1.msra.mxu0 0.0
    %150 = vmatprep.subr.mxu0 0.0
    %151 = vmatpush1.msra.mxu0 0.0
    %152 = vmatprep.subr.mxu0 0.0
    %153 = vmatpush1.msra.mxu0 0.0
    %154 = vmatprep.subr.mxu0 0.0
    %155 = vmatpush1.msra.mxu0 %v121
    %156 = vmatprep.subr.mxu0 0.0
    %157 = vmatpush1.msra.mxu0 %v120
    %158 = vmatprep.subr.mxu0 0.0
    %159 = vmatpush2.msra.mxu0 0.0
    %160 = vmatprep.subr.mxu0 0.0
    %161 = vmatpush2.msra.mxu0 0.0
    %162 = vmatprep.subr.mxu0 0.0
    %163 = vmatpush2.msra.mxu0 0.0
    %164 = vmatprep.subr.mxu0 0.0
    %165 = vmatpush2.msra.mxu0 0.0
    %166 = vmatprep.subr.mxu0 0.0
    %167 = vmatpush2.msra.mxu0 0.0
    %168 = vmatprep.subr.mxu0 0.0
    %169 = vmatpush2.msra.mxu0 0.0
    %170 = vmatprep.subr.mxu0 0.0
    %171 = vmatpush2.msra.mxu0 0.0
    %172 = vmatprep.subr.mxu0 0.0
    %173 = vmatpush2.msra.mxu0 0.0
    %174 = vmatprep.subr.mxu0 0.0
    %175 = vmatpush2.msra.mxu0 0.0
    %176 = vmatprep.subr.mxu0 0.0
    %177 = vmatpush2.msra.mxu0 0.0
    %178 = vmatprep.subr.mxu0 0.0
    %179 = vmatpush2.msra.mxu0 0.0
    %180 = vmatprep.subr.mxu0 0.0
    %181 = vmatpush2.msra.mxu0 0.0
    %182 = vmatprep.subr.mxu0 0.0
    %183 = vmatpush2.msra.mxu0 0.0
    %184 = vmatprep.subr.mxu0 0.0
    %185 = vmatpush2.msra.mxu0 0.0
    %186 = vmatprep.subr.mxu0 0.0
    %187 = vmatpush2.msra.mxu0 0.0
    %188 = vmatprep.subr.mxu0 0.0
    %189 = vmatpush2.msra.mxu0 0.0
    %190 = vmatprep.mubr.f32.mxu0 0.0
    %191 = vmatmul.mubr.f32.gmra.mxu0 %v124
    %v192 = vpop.f32.mrf.mxu0
    %v193 = vadd.f32 0.0, %v192
    %v194 = vpop.f32.mrf.mxu0
    %195 = vdwg.mxu0
    %vm196 = vcmask 261120
    %v198 = vsel %vm196, %v109, 0
    %200 = vmatprep.subr.mxu0 0.0
    %201 = vmatpush1.msra.mxu0 0.0
    %202 = vmatprep.subr.mxu0 0.0
    %203 = vmatpush1.msra.mxu0 0.0
    %204 = vmatprep.subr.mxu0 0.0
    %205 = vmatpush1.msra.mxu0 0.0
    %206 = vmatprep.subr.mxu0 0.0
    %207 = vmatpush1.msra.mxu0 0.0
    %208 = vmatprep.subr.mxu0 0.0
    %209 = vmatpush1.msra.mxu0 0.0
    %210 = vmatprep.subr.mxu0 0.0
    %211 = vmatpush1.msra.mxu0 0.0
    %212 = vmatprep.subr.mxu0 0.0
    %213 = vmatpush1.msra.mxu0 0.0
    %214 = vmatprep.subr.mxu0 0.0
    %215 = vmatpush1.msra.mxu0 0.0
    %216 = vmatprep.subr.mxu0 0.0
    %217 = vmatpush1.msra.mxu0 0.0
    %218 = vmatprep.subr.mxu0 0.0
    %219 = vmatpush1.msra.mxu0 0.0
    %220 = vmatprep.subr.mxu0 0.0
    %221 = vmatpush1.msra.mxu0 0.0
    %222 = vmatprep.subr.mxu0 0.0
    %223 = vmatpush1.msra.mxu0 0.0
    %224 = vmatprep.subr.mxu0 0.0
    %225 = vmatpush1.msra.mxu0 %v113
    %226 = vmatprep.subr.mxu0 0.0
    %227 = vmatpush1.msra.mxu0 %v112
    %228 = vmatprep.subr.mxu0 0.0
    %229 = vmatpush1.msra.mxu0 %v111
    %230 = vmatprep.subr.mxu0 0.0
    %231 = vmatpush1.msra.mxu0 %v110
    %232 = vmatprep.subr.mxu0 0.0
    %233 = vmatpush2.msra.mxu0 0.0
    %234 = vmatprep.subr.mxu0 0.0
    %235 = vmatpush2.msra.mxu0 0.0
    %236 = vmatprep.subr.mxu0 0.0
    %237 = vmatpush2.msra.mxu0 0.0
    %238 = vmatprep.subr.mxu0 0.0
    %239 = vmatpush2.msra.mxu0 0.0
    %240 = vmatprep.subr.mxu0 0.0
    %241 = vmatpush2.msra.mxu0 0.0
    %242 = vmatprep.subr.mxu0 0.0
    %243 = vmatpush2.msra.mxu0 0.0
    %244 = vmatprep.subr.mxu0 0.0
    %245 = vmatpush2.msra.mxu0 0.0
    %246 = vmatprep.subr.mxu0 0.0
    %247 = vmatpush2.msra.mxu0 0.0
    %248 = vmatprep.subr.mxu0 0.0
    %249 = vmatpush2.msra.mxu0 0.0
    %250 = vmatprep.subr.mxu0 0.0
    %251 = vmatpush2.msra.mxu0 0.0
    %252 = vmatprep.subr.mxu0 0.0
    %253 = vmatpush2.msra.mxu0 0.0
    %254 = vmatprep.subr.mxu0 0.0
    %255 = vmatpush2.msra.mxu0 0.0
    %256 = vmatprep.subr.mxu0 0.0
    %257 = vmatpush2.msra.mxu0 0.0
    %258 = vmatprep.subr.mxu0 0.0
    %259 = vmatpush2.msra.mxu0 0.0
    %260 = vmatprep.subr.mxu0 0.0
    %261 = vmatpush2.msra.mxu0 0.0
    %262 = vmatprep.subr.mxu0 0.0
    %263 = vmatpush2.msra.mxu0 0.0
    %264 = vmatprep.mubr.f32.mxu0 0.0
    %265 = vmatmul.mubr.f32.gmra.mxu0 %v198
    %v266 = vpop.f32.mrf.mxu0
    %v267 = vadd.f32 %v193, %v266
    %v268 = vpop.f32.mrf.mxu0
    %269 = vdwg.mxu0
    %v270 = vld [vmem:[#allocation7] sm:$0xff]
    %v271 = vmul.f32 %v270, 0.5
    %v272 = vtanh.pop %v271
    %v273 = vmul.f32 %v272, 0.5
    %v274 = vadd.f32 %v273, 0.5
    %v275 = vmul.f32 %v270, %v274
    %v276 = vld [vmem:[#allocation11] sm:$0xff]
    %v277 = vld [vmem:[#allocation11 + $0x8] sm:$0xff]
    %v278 = vld [vmem:[#allocation11 + $0x10] sm:$0xff]
    %vm279 = vcmask 195584
    %v281 = vsel %vm279, %v275, 0
    %283 = vmatprep.subr.mxu0 0.0
    %284 = vmatpush1.msra.mxu0 0.0
    %285 = vmatprep.subr.mxu0 0.0
    %286 = vmatpush1.msra.mxu0 0.0
    %287 = vmatprep.subr.mxu0 0.0
    %288 = vmatpush1.msra.mxu0 0.0
    %289 = vmatprep.subr.mxu0 0.0
    %290 = vmatpush1.msra.mxu0 0.0
    %291 = vmatprep.subr.mxu0 0.0
    %292 = vmatpush1.msra.mxu0 0.0
    %293 = vmatprep.subr.mxu0 0.0
    %294 = vmatpush1.msra.mxu0 0.0
    %295 = vmatprep.subr.mxu0 0.0
    %296 = vmatpush1.msra.mxu0 0.0
    %297 = vmatprep.subr.mxu0 0.0
    %298 = vmatpush1.msra.mxu0 0.0
    %299 = vmatprep.subr.mxu0 0.0
    %300 = vmatpush1.msra.mxu0 0.0
    %301 = vmatprep.subr.mxu0 0.0
    %302 = vmatpush1.msra.mxu0 0.0
    %303 = vmatprep.subr.mxu0 0.0
    %304 = vmatpush1.msra.mxu0 0.0
    %305 = vmatprep.subr.mxu0 0.0
    %306 = vmatpush1.msra.mxu0 0.0
    %307 = vmatprep.subr.mxu0 0.0
    %308 = vmatpush1.msra.mxu0 0.0
    %309 = vmatprep.subr.mxu0 0.0
    %310 = vmatpush1.msra.mxu0 %v278
    %311 = vmatprep.subr.mxu0 0.0
    %312 = vmatpush1.msra.mxu0 %v277
    %313 = vmatprep.subr.mxu0 0.0
    %314 = vmatpush1.msra.mxu0 %v276
    %315 = vmatprep.subr.mxu0 0.0
    %316 = vmatpush2.msra.mxu0 0.0
    %317 = vmatprep.subr.mxu0 0.0
    %318 = vmatpush2.msra.mxu0 0.0
    %319 = vmatprep.subr.mxu0 0.0
    %320 = vmatpush2.msra.mxu0 0.0
    %321 = vmatprep.subr.mxu0 0.0
    %322 = vmatpush2.msra.mxu0 0.0
    %323 = vmatprep.subr.mxu0 0.0
    %324 = vmatpush2.msra.mxu0 0.0
    %325 = vmatprep.subr.mxu0 0.0
    %326 = vmatpush2.msra.mxu0 0.0
    %327 = vmatprep.subr.mxu0 0.0
    %328 = vmatpush2.msra.mxu0 0.0
    %329 = vmatprep.subr.mxu0 0.0
    %330 = vmatpush2.msra.mxu0 0.0
    %331 = vmatprep.subr.mxu0 0.0
    %332 = vmatpush2.msra.mxu0 0.0
    %333 = vmatprep.subr.mxu0 0.0
    %334 = vmatpush2.msra.mxu0 0.0
    %335 = vmatprep.subr.mxu0 0.0
    %336 = vmatpush2.msra.mxu0 0.0
    %337 = vmatprep.subr.mxu0 0.0
    %338 = vmatpush2.msra.mxu0 0.0
    %339 = vmatprep.subr.mxu0 0.0
    %340 = vmatpush2.msra.mxu0 0.0
    %341 = vmatprep.subr.mxu0 0.0
    %342 = vmatpush2.msra.mxu0 0.0
    %343 = vmatprep.subr.mxu0 0.0
    %344 = vmatpush2.msra.mxu0 0.0
    %345 = vmatprep.subr.mxu0 0.0
    %346 = vmatpush2.msra.mxu0 0.0
    %347 = vmatprep.mubr.f32.mxu0 0.0
    %348 = vmatmul.mubr.f32.gmra.mxu0 %v281
    %v349 = vpop.f32.mrf.mxu0
    %v350 = vadd.f32 0.0, %v349
    %v351 = vpop.f32.mrf.mxu0
    %352 = vdwg.mxu0
    %v353 = vadd.f32 %v267, %v350
    %v354 = vld [vmem:[%s6] sm:$0x1]
    %v356 = vlaneseq
    %v357 = vshrl.u32 %v356, 7
    %v358 = vsub.s32 0, %v357
    %v359 = vrot.slane %v354, %v358
    %v361 = vadd.f32 %v353, %v359
    %362 = vadd.xlane.f32.xlu0 %v361
    %v363 = vpop.xlane.xlu0 %362
    %v364 = vmul.f32 %v363, 0.015625
    %v365 = vmul.f32 %v361, %v361
    %366 = vadd.xlane.f32.xlu0 %v365
    %v367 = vpop.xlane.xlu0 %366
    %v368 = vmul.f32 %v367, 0.015625
    %v369 = vmul.f32 %v364, %v364
    %v370 = vsub.f32 %v368, %v369
    %v371 = vmax.f32 %v370, 0.0
    %v372 = vsub.f32 %v361, %v364
    %v373 = vadd.f32 %v371, 1e-05
    %v374 = vrsqrt.pop %v373
    %v375 = vmul.f32 %v372, %v374
    %v376 = vld [vmem:[%s7] sm:$0x1]
    %v378 = vlaneseq
    %v379 = vshrl.u32 %v378, 7
    %v380 = vsub.s32 0, %v379
    %v381 = vrot.slane %v376, %v380
    %v383 = vmul.f32 %v375, %v381
    %v384 = vld [vmem:[%s8] sm:$0x1]
    %v386 = vlaneseq
    %v387 = vshrl.u32 %v386, 7
    %v388 = vsub.s32 0, %v387
    %v389 = vrot.slane %v384, %v388
    %v391 = vadd.f32 %v383, %v389
    %v392 = vmul.f32 %v391, 0.5
    %v393 = vtanh.pop %v392
    %v394 = vmul.f32 %v393, 0.5
    %v395 = vadd.f32 %v394, 0.5
    %v396 = vmul.f32 %v391, %v395
    %397 = vst [vmem:[#allocation13] sm:$0xff] %v396
    // Predicated region
    $region62: #{tpu_custom_call.1} parent=1 // pred_check
      _
    $region63: #{tpu_custom_call.1} parent=1 // pred_check_branch
      %399 = sbr.rel (0) target = $region65
    $region64: #{tpu_custom_call.1} parent=1 // pred_region
      %s401 = ssub.s32 128, 128
      %402 = vsyncadd [#allocation4], %s401
      %s404 = sshll.u32 [#allocation13], 4
      %s405 = int_to_ptr.vmem [resolvable:$true] %s404
      %407 = dma.vmem_to_hbm [thread:$0]  %s405, 128, %s9, [#allocation4]
    $region65: #{tpu_custom_call.1} parent=1 // pred_fallthru
      _
    // Predicated region
    $region66: #{tpu_custom_call.1} parent=1 // pred_check
      _
    $region67: #{tpu_custom_call.1} parent=1 // pred_check_branch
      %409 = sbr.rel (0) target = $region69
    $region68: #{tpu_custom_call.1} parent=1 // pred_region
      %410 = dma.done [#allocation4], 128
    $region69: #{tpu_custom_call.1} parent=1 // pred_fallthru
      _
    %411 = vsyncpa [#allocation3], 1
    %412 = vsyncpa [#allocation6], 1
    %413 = vsyncpa [#allocation9], 1
    %414 = vsyncpa [#allocation12], 1
    %415 = vsyncpa [#allocation4], 1

</llo_original>
